<compile_context>
chip_gen: v5e
topology: v5e:2x2
jax: 0.10.0
libtpu: 0.0.40
codegen_flags: <defaults>
</compile_context>

<pallas_src>
import numpy as np
import jax
import jax.numpy as jnp
from jax.experimental import pallas as pl
from jax.experimental.pallas import tpu as pltpu


# ----------------------------------------------------------------------------
# In-kernel math helpers
# ----------------------------------------------------------------------------
def _gelu_tanh(x):
    # tanh-form GELU.  tanh lowers to the EUP (transcendental) slot, leaving
    # only ~6 VALU mul/adds per element vs ~20+ for the erf polynomial.
    # |error vs exact erf GELU| ~ 1e-3, below the bf16-operand tolerance.
    c = np.float32(np.sqrt(2.0 / np.pi))
    a = np.float32(0.044715)
    return 0.5 * x * (1.0 + jnp.tanh(c * (x + a * x * x * x)))


# ----------------------------------------------------------------------------
# Pallas kernel: Linear -> GELU -> Linear -> L2 normalize (F.normalize, dim=-1)
# ----------------------------------------------------------------------------
def _mlp_embed_norm_kernel(x_ref, w1_ref, b1_ref, w2_ref, b2_ref, out_ref):
    # x arrives as f32; cast to bf16 in-kernel (cheap, hides under the MXU)
    # so no separate XLA cast pass over the whole input is needed.
    x = x_ref[...].astype(jnp.bfloat16)
    h = jnp.dot(x, w1_ref[...], preferred_element_type=jnp.float32)   # (TB, D)
    h = h + b1_ref[...]                                                # f32
    h = _gelu_tanh(h)                                                  # f32
    y = jnp.dot(h.astype(jnp.bfloat16), w2_ref[...],
                preferred_element_type=jnp.float32)                    # (TB, D)
    y = y + b2_ref[...]
    # F.normalize(y, dim=-1): y / max(||y||_2, 1e-12) == y * rsqrt(max(ss, 1e-24))
    ss = jnp.sum(y * y, axis=-1, keepdims=True)
    out_ref[...] = (y * jax.lax.rsqrt(jnp.maximum(ss, 1e-24))).astype(out_ref.dtype)


def _pick_tile_b(n, cap=512):
    """Batch tile: full extent when n <= cap; otherwise a multiple of 16 that
    gives an even number of grid steps (balances v7x's two TensorCores).  The
    wrapper pads the batch up to a tile multiple, so the tile never has to
    divide n exactly."""
    if n <= cap:
        return n
    steps = pl.cdiv(n, cap)
    if steps % 2:
        steps += 1              # even step count -> both v7x TCs stay busy
    tile = pl.cdiv(n, steps)
    return ((tile + 15) // 16) * 16   # <= cap since cap is a multiple of 16


def mlp_embed_normalize(x, w1, b1, w2, b2, *, tile_b=None, out_dtype=jnp.float32):
    """Fused Linear -> GELU -> Linear -> L2-normalize over rows of x: (B,D)->(B,D)."""
    B, D = x.shape
    if tile_b is None:
        tile_b = _pick_tile_b(B)
    b_pad = pl.cdiv(B, tile_b) * tile_b

    x_f = x.astype(jnp.float32)
    if b_pad != B:
        # Zero-pad ragged batches; zero rows produce zero output rows (no NaN)
        # and are sliced off below.
        x_f = jnp.pad(x_f, ((0, b_pad - B), (0, 0)))

    # Weights as bf16 MXU operands (cast once, outside the grid loop); biases
    # stay f32 (added to the f32 accumulators).
    w1_16 = w1.astype(jnp.bfloat16)
    w2_16 = w2.astype(jnp.bfloat16)
    b1_f = b1.astype(jnp.float32).reshape(1, D)
    b2_f = b2.astype(jnp.float32).reshape(1, D)

    def call(single_buffer_consts):
        const_kwargs = {}
        if single_buffer_consts:
            # Constant-index blocks are fetched once; a second pipeline buffer
            # is pure VMEM waste (~2.3 MiB at D=768 bf16).
            const_kwargs = dict(pipeline_mode=pl.Buffered(1))

        def const_spec(shape):
            return pl.BlockSpec(shape, lambda i: (0, 0), **const_kwargs)

        # VMEM at tile_b=512, D=768: x f32 tile 2x1.5MB + out f32 2x1.5MB +
        # bf16 weights 2x1.125MB (single-buffered) + biases + ~8MB of f32
        # intermediates (h, GELU temps, y)  ~= 17 MiB.  Ask for 40 MiB
        # explicitly: above v5e's 16 MiB scoped default, below v7x's 64 MiB
        # physical VMEM.
        return pl.pallas_call(
            _mlp_embed_norm_kernel,
            out_shape=jax.ShapeDtypeStruct((b_pad, D), out_dtype),
            grid=(b_pad // tile_b,),
            in_specs=[
                pl.BlockSpec((tile_b, D), lambda i: (i, 0)),   # x tile
                const_spec((D, D)),                            # w1 (resident)
                const_spec((1, D)),                            # b1
                const_spec((D, D)),                            # w2 (resident)
                const_spec((1, D)),                            # b2
            ],
            out_specs=pl.BlockSpec((tile_b, D), lambda i: (i, 0)),
            compiler_params=pltpu.CompilerParams(
                dimension_semantics=("parallel",),
                vmem_limit_bytes=40 * 1024 * 1024),
        )(x_f, w1_16, b1_f, w2_16, b2_f)

    try:
        out = call(single_buffer_consts=True)
    except Exception:
        # pipeline_mode / pl.Buffered(1) unsupported in this jax build:
        # fall back to default double buffering (only costs a little VMEM).
        out = call(single_buffer_consts=False)

    return out[:B] if b_pad != B else out


# ----------------------------------------------------------------------------
# Module parameters (deterministic init, mirrors CLP_clinical.__init__)
# ----------------------------------------------------------------------------
def init_clp_params(key, embed_dim):
    k1, k2, k3, k4 = jax.random.split(key, 4)
    std = embed_dim ** (-0.5)          # nn.init.normal_(weight, std=D**-0.5)
    bound = 1.0 / np.sqrt(embed_dim)   # default nn.Linear bias init
    params = {
        # stored as [in, out] = W.T of PyTorch nn.Linear
        "w1": std * jax.random.normal(k1, (embed_dim, embed_dim), jnp.float32),
        "b1": jax.random.uniform(k2, (1, embed_dim), jnp.float32, -bound, bound),
        "w2": std * jax.random.normal(k3, (embed_dim, embed_dim), jnp.float32),
        "b2": jax.random.uniform(k4, (1, embed_dim), jnp.float32, -bound, bound),
        "logit_scale": jnp.asarray(np.log(1.0 / 0.07), jnp.float32),
    }
    return params


def clp_clinical_forward(pooler_out_1, pooler_out_2, params):
    """Equivalent of CLP_clinical.forward given the two BERT pooler outputs.

    Both inputs are stacked and run through ONE pallas_call so the resident
    D x D weights are fetched a single time and the grid has more work.
    """
    B = pooler_out_1.shape[0]
    x = jnp.concatenate([pooler_out_1, pooler_out_2], axis=0)     # (2B, D)
    feats = mlp_embed_normalize(x, params["w1"], params["b1"],
                                params["w2"], params["b2"])
    return feats[:B], feats[B:], jnp.exp(params["logit_scale"])


# ----------------------------------------------------------------------------
# Pure-JAX f32 reference (exact-erf GELU, as in nn.GELU()) for sanity checking
# ----------------------------------------------------------------------------
def _reference(x, params):
    h = x @ params["w1"] + params["b1"]
    h = jax.nn.gelu(h, approximate=False)
    y = h @ params["w2"] + params["b2"]
    norm = jnp.sqrt(jnp.sum(y * y, axis=-1, keepdims=True))
    return y / jnp.maximum(norm, 1e-12)


if __name__ == "__main__":
    B, D = 8, 256   # small batch / embed_dim (module default is 768)
    key = jax.random.PRNGKey(0)
    kp, kx1, kx2 = jax.random.split(key, 3)

    params = init_clp_params(kp, D)
    # Surrogate BERT pooler outputs for text1 / text2 (see TODO above).
    pooler1 = jax.random.normal(kx1, (B, D), jnp.float32)
    pooler2 = jax.random.normal(kx2, (B, D), jnp.float32)

    f1, f2, scale = clp_clinical_forward(pooler1, pooler2, params)
    jax.block_until_ready((f1, f2, scale))

    # Sanity check against the pure-JAX f32 reference (bf16 MXU operands +
    # tanh-GELU -> 2e-2 tolerance).
    r1 = _reference(pooler1, params)
    r2 = _reference(pooler2, params)
    np.testing.assert_allclose(np.asarray(f1), np.asarray(r1), rtol=2e-2, atol=2e-2)
    np.testing.assert_allclose(np.asarray(f2), np.asarray(r2), rtol=2e-2, atol=2e-2)
    assert abs(float(scale) - 1.0 / 0.07) < 1e-3
    # Outputs are unit-norm rows (normalize runs in f32, so this is tight).
    np.testing.assert_allclose(np.linalg.norm(np.asarray(f1), axis=-1),
                               np.ones(B), rtol=1e-5, atol=1e-5)
    np.testing.assert_allclose(np.linalg.norm(np.asarray(f2), axis=-1),
                               np.ones(B), rtol=1e-5, atol=1e-5)

    print("KERNEL_OK")
</pallas_src>

<mosaic_0001>
module attributes {stable_mosaic.version = 11 : i64} {
  func.func @_mlp_embed_norm_kernel(%arg0: i32, %arg1: memref<16x256xf32, #tpu.memory_space<vmem>>, %arg2: memref<256x256xbf16, #tpu.memory_space<vmem>>, %arg3: memref<1x256xf32, #tpu.memory_space<vmem>>, %arg4: memref<256x256xbf16, #tpu.memory_space<vmem>>, %arg5: memref<1x256xf32, #tpu.memory_space<vmem>>, %arg6: memref<16x256xf32, #tpu.memory_space<vmem>>) attributes {dimension_semantics = [#tpu.dimension_semantics<parallel>], iteration_bounds = array<i64: 1>, scalar_prefetch = 0 : i64, scratch_operands = 0 : i64, tpu.core_type = #tpu.core_type<tc>, window_params = [{transform_indices = @transform_0, window_bounds = array<i64: 16, 256>}, {pipeline_mode = #tpu.pipeline_mode<synchronous>, transform_indices = @transform_1, window_bounds = array<i64: 256, 256>}, {pipeline_mode = #tpu.pipeline_mode<synchronous>, transform_indices = @transform_2, window_bounds = array<i64: 1, 256>}, {pipeline_mode = #tpu.pipeline_mode<synchronous>, transform_indices = @transform_3, window_bounds = array<i64: 256, 256>}, {pipeline_mode = #tpu.pipeline_mode<synchronous>, transform_indices = @transform_4, window_bounds = array<i64: 1, 256>}, {transform_indices = @transform_5, window_bounds = array<i64: 16, 256>}]} {
    %c0 = arith.constant 0 : index
    %c0_0 = arith.constant 0 : index
    %0 = vector.load %arg1[%c0, %c0_0] : memref<16x256xf32, #tpu.memory_space<vmem>>, vector<16x256xf32>
    %1 = arith.truncf %0 : vector<16x256xf32> to vector<16x256xbf16>
    %c0_1 = arith.constant 0 : index
    %c0_2 = arith.constant 0 : index
    %2 = vector.load %arg2[%c0_1, %c0_2] : memref<256x256xbf16, #tpu.memory_space<vmem>>, vector<256x256xbf16>
    %cst = arith.constant dense<0.000000e+00> : vector<16x256xf32>
    %3 = tpu.matmul %1, %2, %cst {dimension_numbers = #tpu.dot_dimension_numbers<[1], [0], [0], [1], [0, 0, 1, 1], [], []>} : vector<16x256xbf16>, vector<256x256xbf16>, vector<16x256xf32> -> vector<16x256xf32>
    %c0_3 = arith.constant 0 : index
    %c0_4 = arith.constant 0 : index
    %4 = vector.load %arg3[%c0_3, %c0_4] : memref<1x256xf32, #tpu.memory_space<vmem>>, vector<1x256xf32>
    %5 = vector.broadcast %4 : vector<1x256xf32> to vector<16x256xf32>
    %6 = arith.addf %3, %5 : vector<16x256xf32>
    %cst_5 = arith.constant 5.000000e-01 : f32
    %7 = vector.broadcast %cst_5 : f32 to vector<16x256xf32>
    %8 = arith.mulf %7, %6 : vector<16x256xf32>
    %cst_6 = arith.constant 4.471500e-02 : f32
    %9 = vector.broadcast %cst_6 : f32 to vector<16x256xf32>
    %10 = arith.mulf %9, %6 : vector<16x256xf32>
    %11 = arith.mulf %10, %6 : vector<16x256xf32>
    %12 = arith.mulf %11, %6 : vector<16x256xf32>
    %13 = arith.addf %6, %12 : vector<16x256xf32>
    %cst_7 = arith.constant 0.797884583 : f32
    %14 = vector.broadcast %cst_7 : f32 to vector<16x256xf32>
    %15 = arith.mulf %14, %13 : vector<16x256xf32>
    %16 = math.tanh %15 : vector<16x256xf32>
    %cst_8 = arith.constant 1.000000e+00 : f32
    %17 = vector.broadcast %cst_8 : f32 to vector<16x256xf32>
    %18 = arith.addf %17, %16 : vector<16x256xf32>
    %19 = arith.mulf %8, %18 : vector<16x256xf32>
    %20 = arith.truncf %19 : vector<16x256xf32> to vector<16x256xbf16>
    %c0_9 = arith.constant 0 : index
    %c0_10 = arith.constant 0 : index
    %21 = vector.load %arg4[%c0_9, %c0_10] : memref<256x256xbf16, #tpu.memory_space<vmem>>, vector<256x256xbf16>
    %cst_11 = arith.constant dense<0.000000e+00> : vector<16x256xf32>
    %22 = tpu.matmul %20, %21, %cst_11 {dimension_numbers = #tpu.dot_dimension_numbers<[1], [0], [0], [1], [0, 0, 1, 1], [], []>} : vector<16x256xbf16>, vector<256x256xbf16>, vector<16x256xf32> -> vector<16x256xf32>
    %c0_12 = arith.constant 0 : index
    %c0_13 = arith.constant 0 : index
    %23 = vector.load %arg5[%c0_12, %c0_13] : memref<1x256xf32, #tpu.memory_space<vmem>>, vector<1x256xf32>
    %24 = vector.broadcast %23 : vector<1x256xf32> to vector<16x256xf32>
    %25 = arith.addf %22, %24 : vector<16x256xf32>
    %26 = arith.mulf %25, %25 : vector<16x256xf32>
    %cst_14 = arith.constant dense<0.000000e+00> : vector<16xf32>
    %27 = vector.multi_reduction <add>, %26, %cst_14 [1] : vector<16x256xf32> to vector<16xf32>
    %28 = vector.shape_cast %27 : vector<16xf32> to vector<16x1xf32>
    %cst_15 = arith.constant 1.000000e-24 : f32
    %29 = vector.broadcast %cst_15 : f32 to vector<16x1xf32>
    %30 = arith.maximumf %28, %29 : vector<16x1xf32>
    %31 = math.rsqrt %30 : vector<16x1xf32>
    %32 = vector.broadcast %31 : vector<16x1xf32> to vector<16x256xf32>
    %33 = arith.mulf %25, %32 : vector<16x256xf32>
    %c0_16 = arith.constant 0 : index
    %c0_17 = arith.constant 0 : index
    %34 = vector.load %arg6[%c0_16, %c0_17] : memref<16x256xf32, #tpu.memory_space<vmem>>, vector<16x256xf32>
    tpu.vector_store %arg6[%c0_16, %c0_17], %33 {strides = array<i32>} : memref<16x256xf32, #tpu.memory_space<vmem>>, vector<16x256xf32>,
    return
  }
  func.func @transform_0(%arg0: i32) -> (i32, i32) {
    %c0_i32 = arith.constant 0 : i32
    %c0_i32_0 = arith.constant 0 : i32
    return %arg0, %c0_i32 : i32, i32
  }
  func.func @transform_1(%arg0: i32) -> (i32, i32) {
    %c0_i32 = arith.constant 0 : i32
    %c0_i32_0 = arith.constant 0 : i32
    %c0_i32_1 = arith.constant 0 : i32
    return %c0_i32, %c0_i32_0 : i32, i32
  }
  func.func @transform_2(%arg0: i32) -> (i32, i32) {
    %c0_i32 = arith.constant 0 : i32
    %c0_i32_0 = arith.constant 0 : i32
    %c0_i32_1 = arith.constant 0 : i32
    return %c0_i32, %c0_i32_0 : i32, i32
  }
  func.func @transform_3(%arg0: i32) -> (i32, i32) {
    %c0_i32 = arith.constant 0 : i32
    %c0_i32_0 = arith.constant 0 : i32
    %c0_i32_1 = arith.constant 0 : i32
    return %c0_i32, %c0_i32_0 : i32, i32
  }
  func.func @transform_4(%arg0: i32) -> (i32, i32) {
    %c0_i32 = arith.constant 0 : i32
    %c0_i32_0 = arith.constant 0 : i32
    %c0_i32_1 = arith.constant 0 : i32
    return %c0_i32, %c0_i32_0 : i32, i32
  }
  func.func @transform_5(%arg0: i32) -> (i32, i32) {
    %c0_i32 = arith.constant 0 : i32
    %c0_i32_0 = arith.constant 0 : i32
    return %arg0, %c0_i32 : i32, i32
  }
}

module attributes {stable_mosaic.version = 11 : i64} {
  func.func @_mlp_embed_norm_kernel(%arg0: i32, %arg1: memref<16x256xf32, #tpu.memory_space<vmem>>, %arg2: memref<256x256xbf16, #tpu.memory_space<vmem>>, %arg3: memref<1x256xf32, #tpu.memory_space<vmem>>, %arg4: memref<256x256xbf16, #tpu.memory_space<vmem>>, %arg5: memref<1x256xf32, #tpu.memory_space<vmem>>, %arg6: memref<16x256xf32, #tpu.memory_space<vmem>>) attributes {dimension_semantics = [#tpu.dimension_semantics<parallel>], iteration_bounds = array<i64: 1>, scalar_prefetch = 0 : i64, scratch_operands = 0 : i64, tpu.core_type = #tpu.core_type<tc>, window_params = [{transform_indices = @transform_0, window_bounds = array<i64: 16, 256>}, {pipeline_mode = #tpu.pipeline_mode<synchronous>, transform_indices = @transform_1, window_bounds = array<i64: 256, 256>}, {pipeline_mode = #tpu.pipeline_mode<synchronous>, transform_indices = @transform_2, window_bounds = array<i64: 1, 256>}, {pipeline_mode = #tpu.pipeline_mode<synchronous>, transform_indices = @transform_3, window_bounds = array<i64: 256, 256>}, {pipeline_mode = #tpu.pipeline_mode<synchronous>, transform_indices = @transform_4, window_bounds = array<i64: 1, 256>}, {transform_indices = @transform_5, window_bounds = array<i64: 16, 256>}]} {
    %c0 = arith.constant 0 : index
    %c0_0 = arith.constant 0 : index
    %0 = vector.load %arg1[%c0, %c0_0] : memref<16x256xf32, #tpu.memory_space<vmem>>, vector<16x256xf32>
    %1 = arith.truncf %0 : vector<16x256xf32> to vector<16x256xbf16>
    %c0_1 = arith.constant 0 : index
    %c0_2 = arith.constant 0 : index
    %2 = vector.load %arg2[%c0_1, %c0_2] : memref<256x256xbf16, #tpu.memory_space<vmem>>, vector<256x256xbf16>
    %cst = arith.constant dense<0.000000e+00> : vector<16x256xf32>
    %3 = tpu.matmul %1, %2, %cst {dimension_numbers = #tpu.dot_dimension_numbers<[1], [0], [0], [1], [0, 0, 1, 1], [], []>} : vector<16x256xbf16>, vector<256x256xbf16>, vector<16x256xf32> -> vector<16x256xf32>
    %c0_3 = arith.constant 0 : index
    %c0_4 = arith.constant 0 : index
    %4 = vector.load %arg3[%c0_3, %c0_4] : memref<1x256xf32, #tpu.memory_space<vmem>>, vector<1x256xf32>
    %5 = vector.broadcast %4 : vector<1x256xf32> to vector<16x256xf32>
    %6 = arith.addf %3, %5 : vector<16x256xf32>
    %cst_5 = arith.constant 5.000000e-01 : f32
    %7 = vector.broadcast %cst_5 : f32 to vector<16x256xf32>
    %8 = arith.mulf %7, %6 : vector<16x256xf32>
    %cst_6 = arith.constant 4.471500e-02 : f32
    %9 = vector.broadcast %cst_6 : f32 to vector<16x256xf32>
    %10 = arith.mulf %9, %6 : vector<16x256xf32>
    %11 = arith.mulf %10, %6 : vector<16x256xf32>
    %12 = arith.mulf %11, %6 : vector<16x256xf32>
    %13 = arith.addf %6, %12 : vector<16x256xf32>
    %cst_7 = arith.constant 0.797884583 : f32
    %14 = vector.broadcast %cst_7 : f32 to vector<16x256xf32>
    %15 = arith.mulf %14, %13 : vector<16x256xf32>
    %16 = math.tanh %15 : vector<16x256xf32>
    %cst_8 = arith.constant 1.000000e+00 : f32
    %17 = vector.broadcast %cst_8 : f32 to vector<16x256xf32>
    %18 = arith.addf %17, %16 : vector<16x256xf32>
    %19 = arith.mulf %8, %18 : vector<16x256xf32>
    %20 = arith.truncf %19 : vector<16x256xf32> to vector<16x256xbf16>
    %c0_9 = arith.constant 0 : index
    %c0_10 = arith.constant 0 : index
    %21 = vector.load %arg4[%c0_9, %c0_10] : memref<256x256xbf16, #tpu.memory_space<vmem>>, vector<256x256xbf16>
    %cst_11 = arith.constant dense<0.000000e+00> : vector<16x256xf32>
    %22 = tpu.matmul %20, %21, %cst_11 {dimension_numbers = #tpu.dot_dimension_numbers<[1], [0], [0], [1], [0, 0, 1, 1], [], []>} : vector<16x256xbf16>, vector<256x256xbf16>, vector<16x256xf32> -> vector<16x256xf32>
    %c0_12 = arith.constant 0 : index
    %c0_13 = arith.constant 0 : index
    %23 = vector.load %arg5[%c0_12, %c0_13] : memref<1x256xf32, #tpu.memory_space<vmem>>, vector<1x256xf32>
    %24 = vector.broadcast %23 : vector<1x256xf32> to vector<16x256xf32>
    %25 = arith.addf %22, %24 : vector<16x256xf32>
    %26 = arith.mulf %25, %25 : vector<16x256xf32>
    %cst_14 = arith.constant dense<0.000000e+00> : vector<16xf32>
    %27 = vector.multi_reduction <add>, %26, %cst_14 [1] : vector<16x256xf32> to vector<16xf32>
    %28 = vector.shape_cast %27 : vector<16xf32> to vector<16x1xf32>
    %cst_15 = arith.constant 1.000000e-24 : f32
    %29 = vector.broadcast %cst_15 : f32 to vector<16x1xf32>
    %30 = arith.maximumf %28, %29 : vector<16x1xf32>
    %31 = math.rsqrt %30 : vector<16x1xf32>
    %32 = vector.broadcast %31 : vector<16x1xf32> to vector<16x256xf32>
    %33 = arith.mulf %25, %32 : vector<16x256xf32>
    %c0_16 = arith.constant 0 : index
    %c0_17 = arith.constant 0 : index
    %34 = vector.load %arg6[%c0_16, %c0_17] : memref<16x256xf32, #tpu.memory_space<vmem>>, vector<16x256xf32>
    tpu.vector_store %arg6[%c0_16, %c0_17], %33 {strides = array<i32>} : memref<16x256xf32, #tpu.memory_space<vmem>>, vector<16x256xf32>,
    return
  }
  func.func @transform_0(%arg0: i32) -> (i32, i32) {
    %c0_i32 = arith.constant 0 : i32
    %c0_i32_0 = arith.constant 0 : i32
    return %arg0, %c0_i32 : i32, i32
  }
  func.func @transform_1(%arg0: i32) -> (i32, i32) {
    %c0_i32 = arith.constant 0 : i32
    %c0_i32_0 = arith.constant 0 : i32
    %c0_i32_1 = arith.constant 0 : i32
    return %c0_i32, %c0_i32_0 : i32, i32
  }
  func.func @transform_2(%arg0: i32) -> (i32, i32) {
    %c0_i32 = arith.constant 0 : i32
    %c0_i32_0 = arith.constant 0 : i32
    %c0_i32_1 = arith.constant 0 : i32
    return %c0_i32, %c0_i32_0 : i32, i32
  }
  func.func @transform_3(%arg0: i32) -> (i32, i32) {
    %c0_i32 = arith.constant 0 : i32
    %c0_i32_0 = arith.constant 0 : i32
    %c0_i32_1 = arith.constant 0 : i32
    return %c0_i32, %c0_i32_0 : i32, i32
  }
  func.func @transform_4(%arg0: i32) -> (i32, i32) {
    %c0_i32 = arith.constant 0 : i32
    %c0_i32_0 = arith.constant 0 : i32
    %c0_i32_1 = arith.constant 0 : i32
    return %c0_i32, %c0_i32_0 : i32, i32
  }
  func.func @transform_5(%arg0: i32) -> (i32, i32) {
    %c0_i32 = arith.constant 0 : i32
    %c0_i32_0 = arith.constant 0 : i32
    return %arg0, %c0_i32 : i32, i32
  }
}

</mosaic_0001>

<llo_original>
// kernel: tpu_custom_call.1
$region0: #{tpu_custom_call.1}
  #allocation0 [shape = 'u32[]', space=smem, size = 0x4, offset = 0x4, fixed_abs, tag = 'smem constant byte address 0x4 - core index']
  #allocation1 [shape = 'u32[72,128]{1,0:T(1,128)}', space=vmem, size = 0x9000, scoped, tag = 'internal scratch']
  %s0 = inlined_call_operand.hbm [shape: f32[16,256], index: 0, kind: input, shape index: {}]
  %s1 = inlined_call_operand.hbm [shape: bf16[256,256], index: 1, kind: input, shape index: {}]
  %s2 = inlined_call_operand.hbm [shape: f32[1,256], index: 2, kind: input, shape index: {}]
  %s3 = inlined_call_operand.hbm [shape: bf16[256,256], index: 3, kind: input, shape index: {}]
  %s4 = inlined_call_operand.vmem [shape: f32[1,256], index: 4, kind: input, shape index: {}]
  %s5 = inlined_call_operand.hbm [shape: f32[16,256], index: 5, kind: output, shape index: {}]
  %s6 = sld [smem:[#allocation0]]
  $region46: #{tpu_custom_call.1} parent=0
    _
  %s8 = ssub.s32 1, %s6
  %s9 = scalar_select 0, %s8, %s6
  $region1: #{tpu_custom_call.1} parent=0
    #allocation2 [shape = 'u8[16384]{0}', space=vmem, size = 0x4000, scoped, tag = 'input window, operand 0, single buffered']
    #allocation3 [shape = 's32[1]{0}', space=sflag, size = 0x4, scoped, tag = 'scoped memory for tpu_custom_call.1']
    #allocation4 [shape = 's32[1]{0}', space=sflag, size = 0x4, scoped, tag = 'scoped memory for tpu_custom_call.1']
    #allocation5 [shape = 'u8[131072]{0}', space=vmem, size = 0x20000, scoped, tag = 'input window, operand 1, single buffered']
    #allocation6 [shape = 's32[1]{0}', space=sflag, size = 0x4, scoped, tag = 'scoped memory for tpu_custom_call.1']
    #allocation7 [shape = 'u8[1024]{0}', space=vmem, size = 0x400, scoped, tag = 'input window, operand 2, single buffered']
    #allocation8 [shape = 'u8[131072]{0}', space=vmem, size = 0x20000, scoped, tag = 'input window, operand 3, single buffered']
    #allocation9 [shape = 's32[1]{0}', space=sflag, size = 0x4, scoped, tag = 'scoped memory for tpu_custom_call.1']
    #allocation10 [shape = 'u8[16384]{0}', space=vmem, size = 0x4000, scoped, tag = 'output window, operand 0, single buffered']
    %10 = vsyncpa [#allocation3], 0
    %11 = vsyncpa [#allocation6], 0
    %12 = vsyncpa [#allocation9], 0
    %13 = vsyncpa [#allocation4], 0
    // Predicated region
    $region2: #{tpu_custom_call.1} parent=1 // pred_check
      _
    $region3: #{tpu_custom_call.1} parent=1 // pred_check_branch
      %15 = sbr.rel (0) target = $region5
    $region4: #{tpu_custom_call.1} parent=1 // pred_region
      %17 = vsyncadd [#allocation3], 0
      %s18 = sshll.u32 %s0, 4
      %s19 = int_to_ptr.hbm [resolvable:$true] %s18
      %s20 = sshll.u32 [#allocation2], 4
      %s21 = int_to_ptr.vmem [resolvable:$true] %s20
      %26 = dma.hbm_to_vmem [thread:$0]  %s19, 512, %s21, [#allocation3], 256, 256, 16
    $region5: #{tpu_custom_call.1} parent=1 // pred_fallthru
      _
    // Predicated region
    $region6: #{tpu_custom_call.1} parent=1 // pred_check
      _
    $region7: #{tpu_custom_call.1} parent=1 // pred_check_branch
      %28 = sbr.rel (0) target = $region9
    $region8: #{tpu_custom_call.1} parent=1 // pred_region
      %30 = vsyncadd [#allocation6], 0
      %s31 = sshll.u32 %s1, 4
      %s32 = int_to_ptr.hbm [resolvable:$true] %s31
      %s33 = sshll.u32 [#allocation5], 4
      %s34 = int_to_ptr.vmem [resolvable:$true] %s33
      %39 = dma.hbm_to_vmem [thread:$0]  %s32, 4096, %s34, [#allocation6], 128, 128, 8
    $region9: #{tpu_custom_call.1} parent=1 // pred_fallthru
      _
    // Predicated region
    $region10: #{tpu_custom_call.1} parent=1 // pred_check
      _
    $region11: #{tpu_custom_call.1} parent=1 // pred_check_branch
      %41 = sbr.rel (0) target = $region13
    $region12: #{tpu_custom_call.1} parent=1 // pred_region
      %43 = vsyncadd [#allocation6], 0
      %s45 = sshll.u32 %s2, 4
      %s46 = int_to_ptr.hbm [resolvable:$true] %s45
      %s47 = sshll.u32 [#allocation7], 4
      %s48 = int_to_ptr.vmem [resolvable:$true] %s47
      %50 = dma.hbm_to_vmem [thread:$0]  %s46, 32, %s48, [#allocation6]
    $region13: #{tpu_custom_call.1} parent=1 // pred_fallthru
      _
    // Predicated region
    $region14: #{tpu_custom_call.1} parent=1 // pred_check
      _
    $region15: #{tpu_custom_call.1} parent=1 // pred_check_branch
      %52 = sbr.rel (0) target = $region17
    $region16: #{tpu_custom_call.1} parent=1 // pred_region
      %54 = vsyncadd [#allocation9], 0
      %s55 = sshll.u32 %s3, 4
      %s56 = int_to_ptr.hbm [resolvable:$true] %s55
      %s57 = sshll.u32 [#allocation8], 4
      %s58 = int_to_ptr.vmem [resolvable:$true] %s57
      %63 = dma.hbm_to_vmem [thread:$0]  %s56, 4096, %s58, [#allocation9], 128, 128, 8
    $region17: #{tpu_custom_call.1} parent=1 // pred_fallthru
      _
    // Predicated region
    $region18: #{tpu_custom_call.1} parent=1 // pred_check
      _
    $region19: #{tpu_custom_call.1} parent=1 // pred_check_branch
      %65 = sbr.rel (0) target = $region21
    $region20: #{tpu_custom_call.1} parent=1 // pred_region
      _
    $region21: #{tpu_custom_call.1} parent=1 // pred_fallthru
      _
    // Predicated region
    $region22: #{tpu_custom_call.1} parent=1 // pred_check
      _
    $region23: #{tpu_custom_call.1} parent=1 // pred_check_branch
      %67 = sbr.rel (0) target = $region25
    $region24: #{tpu_custom_call.1} parent=1 // pred_region
      %69 = dma.done [#allocation3], 512
    $region25: #{tpu_custom_call.1} parent=1 // pred_fallthru
      _
    // Predicated region
    $region26: #{tpu_custom_call.1} parent=1 // pred_check
      _
    $region27: #{tpu_custom_call.1} parent=1 // pred_check_branch
      %71 = sbr.rel (0) target = $region29
    $region28: #{tpu_custom_call.1} parent=1 // pred_region
      %73 = dma.done [#allocation6], 4096
    $region29: #{tpu_custom_call.1} parent=1 // pred_fallthru
      _
    // Predicated region
    $region30: #{tpu_custom_call.1} parent=1 // pred_check
      _
    $region31: #{tpu_custom_call.1} parent=1 // pred_check_branch
      %75 = sbr.rel (0) target = $region33
    $region32: #{tpu_custom_call.1} parent=1 // pred_region
      %77 = dma.done [#allocation6], 32
    $region33: #{tpu_custom_call.1} parent=1 // pred_fallthru
      _
    // Predicated region
    $region34: #{tpu_custom_call.1} parent=1 // pred_check
      _
    $region35: #{tpu_custom_call.1} parent=1 // pred_check_branch
      %79 = sbr.rel (0) target = $region37
    $region36: #{tpu_custom_call.1} parent=1 // pred_region
      %81 = dma.done [#allocation9], 4096
    $region37: #{tpu_custom_call.1} parent=1 // pred_fallthru
      _
    %v82 = vld [vmem:[#allocation2] sm:$0xff]
    %v83 = vld [vmem:[#allocation2 + $0x8] sm:$0xff]
    %v84 = vld [vmem:[#allocation2 + $0x10] sm:$0xff]
    %v85 = vld [vmem:[#allocation2 + $0x18] sm:$0xff]
    %v86 = vpack.c.bf16 %v84, %v82
    %v87 = vpack.c.bf16 %v85, %v83
    %v88 = vld [vmem:[#allocation5] sm:$0xff]
    %v89 = vld [vmem:[#allocation5 + $0x8] sm:$0xff]
    %v90 = vld [vmem:[#allocation5 + $0x10] sm:$0xff]
    %v91 = vld [vmem:[#allocation5 + $0x18] sm:$0xff]
    %v92 = vld [vmem:[#allocation5 + $0x20] sm:$0xff]
    %v93 = vld [vmem:[#allocation5 + $0x28] sm:$0xff]
    %v94 = vld [vmem:[#allocation5 + $0x30] sm:$0xff]
    %v95 = vld [vmem:[#allocation5 + $0x38] sm:$0xff]
    %v96 = vld [vmem:[#allocation5 + $0x40] sm:$0xff]
    %v97 = vld [vmem:[#allocation5 + $0x48] sm:$0xff]
    %v98 = vld [vmem:[#allocation5 + $0x50] sm:$0xff]
    %v99 = vld [vmem:[#allocation5 + $0x58] sm:$0xff]
    %v100 = vld [vmem:[#allocation5 + $0x60] sm:$0xff]
    %v101 = vld [vmem:[#allocation5 + $0x68] sm:$0xff]
    %v102 = vld [vmem:[#allocation5 + $0x70] sm:$0xff]
    %v103 = vld [vmem:[#allocation5 + $0x78] sm:$0xff]
    %v104 = vld [vmem:[#allocation5 + $0x80] sm:$0xff]
    %v105 = vld [vmem:[#allocation5 + $0x88] sm:$0xff]
    %v106 = vld [vmem:[#allocation5 + $0x90] sm:$0xff]
    %v107 = vld [vmem:[#allocation5 + $0x98] sm:$0xff]
    %v108 = vld [vmem:[#allocation5 + $0xa0] sm:$0xff]
    %v109 = vld [vmem:[#allocation5 + $0xa8] sm:$0xff]
    %v110 = vld [vmem:[#allocation5 + $0xb0] sm:$0xff]
    %v111 = vld [vmem:[#allocation5 + $0xb8] sm:$0xff]
    %v112 = vld [vmem:[#allocation5 + $0xc0] sm:$0xff]
    %v113 = vld [vmem:[#allocation5 + $0xc8] sm:$0xff]
    %v114 = vld [vmem:[#allocation5 + $0xd0] sm:$0xff]
    %v115 = vld [vmem:[#allocation5 + $0xd8] sm:$0xff]
    %v116 = vld [vmem:[#allocation5 + $0xe0] sm:$0xff]
    %v117 = vld [vmem:[#allocation5 + $0xe8] sm:$0xff]
    %v118 = vld [vmem:[#allocation5 + $0xf0] sm:$0xff]
    %v119 = vld [vmem:[#allocation5 + $0xf8] sm:$0xff]
    %v120 = vld [vmem:[#allocation7] sm:$0x3]
    %v122 = vperm.slane %v120, 0
    %v123 = vperm.slane %v120, 1
    %v158 = vunpack.c.l.b16 %v88
    %v159 = vunpack.c.h.b16 %v88
    %v160 = vunpack.c.l.b16 %v89
    %v161 = vunpack.c.h.b16 %v89
    %v162 = vunpack.c.l.b16 %v90
    %v163 = vunpack.c.h.b16 %v90
    %v164 = vunpack.c.l.b16 %v91
    %v165 = vunpack.c.h.b16 %v91
    %v166 = vunpack.c.l.b16 %v92
    %v167 = vunpack.c.h.b16 %v92
    %v168 = vunpack.c.l.b16 %v93
    %v169 = vunpack.c.h.b16 %v93
    %v170 = vunpack.c.l.b16 %v94
    %v171 = vunpack.c.h.b16 %v94
    %v172 = vunpack.c.l.b16 %v95
    %v173 = vunpack.c.h.b16 %v95
    %v174 = vunpack.c.l.b16 %v96
    %v175 = vunpack.c.h.b16 %v96
    %v176 = vunpack.c.l.b16 %v97
    %v177 = vunpack.c.h.b16 %v97
    %v178 = vunpack.c.l.b16 %v98
    %v179 = vunpack.c.h.b16 %v98
    %v180 = vunpack.c.l.b16 %v99
    %v181 = vunpack.c.h.b16 %v99
    %v182 = vunpack.c.l.b16 %v100
    %v183 = vunpack.c.h.b16 %v100
    %v184 = vunpack.c.l.b16 %v101
    %v185 = vunpack.c.h.b16 %v101
    %v186 = vunpack.c.l.b16 %v102
    %v187 = vunpack.c.h.b16 %v102
    %v188 = vunpack.c.l.b16 %v103
    %v189 = vunpack.c.h.b16 %v103
    %v190 = vunpack.c.l.b16 %v104
    %v191 = vunpack.c.h.b16 %v104
    %v192 = vunpack.c.l.b16 %v105
    %v193 = vunpack.c.h.b16 %v105
    %v194 = vunpack.c.l.b16 %v106
    %v195 = vunpack.c.h.b16 %v106
    %v196 = vunpack.c.l.b16 %v107
    %v197 = vunpack.c.h.b16 %v107
    %v198 = vunpack.c.l.b16 %v108
    %v199 = vunpack.c.h.b16 %v108
    %v200 = vunpack.c.l.b16 %v109
    %v201 = vunpack.c.h.b16 %v109
    %v202 = vunpack.c.l.b16 %v110
    %v203 = vunpack.c.h.b16 %v110
    %v204 = vunpack.c.l.b16 %v111
    %v205 = vunpack.c.h.b16 %v111
    %v206 = vunpack.c.l.b16 %v112
    %v207 = vunpack.c.h.b16 %v112
    %v208 = vunpack.c.l.b16 %v113
    %v209 = vunpack.c.h.b16 %v113
    %v210 = vunpack.c.l.b16 %v114
    %v211 = vunpack.c.h.b16 %v114
    %v212 = vunpack.c.l.b16 %v115
    %v213 = vunpack.c.h.b16 %v115
    %v214 = vunpack.c.l.b16 %v116
    %v215 = vunpack.c.h.b16 %v116
    %v216 = vunpack.c.l.b16 %v117
    %v217 = vunpack.c.h.b16 %v117
    %v218 = vunpack.c.l.b16 %v118
    %v219 = vunpack.c.h.b16 %v118
    %v220 = vunpack.c.l.b16 %v119
    %v221 = vunpack.c.h.b16 %v119
    %v222 = vpack.c.b16 %v160, %v158
    %v223 = vpack.c.b16 %v161, %v159
    %v224 = vpack.c.b16 %v164, %v162
    %v225 = vpack.c.b16 %v165, %v163
    %v226 = vpack.c.b16 %v168, %v166
    %v227 = vpack.c.b16 %v169, %v167
    %v228 = vpack.c.b16 %v172, %v170
    %v229 = vpack.c.b16 %v173, %v171
    %v230 = vpack.c.b16 %v176, %v174
    %v231 = vpack.c.b16 %v177, %v175
    %v232 = vpack.c.b16 %v180, %v178
    %v233 = vpack.c.b16 %v181, %v179
    %v234 = vpack.c.b16 %v184, %v182
    %v235 = vpack.c.b16 %v185, %v183
    %v236 = vpack.c.b16 %v188, %v186
    %v237 = vpack.c.b16 %v189, %v187
    %v238 = vpack.c.b16 %v192, %v190
    %v239 = vpack.c.b16 %v193, %v191
    %v240 = vpack.c.b16 %v196, %v194
    %v241 = vpack.c.b16 %v197, %v195
    %v242 = vpack.c.b16 %v200, %v198
    %v243 = vpack.c.b16 %v201, %v199
    %v244 = vpack.c.b16 %v204, %v202
    %v245 = vpack.c.b16 %v205, %v203
    %v246 = vpack.c.b16 %v208, %v206
    %v247 = vpack.c.b16 %v209, %v207
    %v248 = vpack.c.b16 %v212, %v210
    %v249 = vpack.c.b16 %v213, %v211
    %v250 = vpack.c.b16 %v216, %v214
    %v251 = vpack.c.b16 %v217, %v215
    %v252 = vpack.c.b16 %v220, %v218
    %v253 = vpack.c.b16 %v221, %v219
    %286 = vmatpush.bf16.msra.mxu0 %v236
    %287 = vmatpush.bf16.msra.mxu0 %v234
    %288 = vmatpush.bf16.msra.mxu0 %v232
    %289 = vmatpush.bf16.msra.mxu0 %v230
    %290 = vmatpush.bf16.msra.mxu0 %v228
    %291 = vmatpush.bf16.msra.mxu0 %v226
    %292 = vmatpush.bf16.msra.mxu0 %v224
    %293 = vmatpush.bf16.msra.mxu0 %v222
    %294 = vmatmul.bf16.gmra.mxu0 %v86
    %v295 = vpop.f32.mrf.mxu0
    %v296 = vadd.f32 %v122, %v295
    %v297 = vpop.f32.mrf.mxu0
    %v298 = vadd.f32 %v122, %v297
    %299 = vdwg.mxu0
    %300 = vmatpush.bf16.msra.mxu0 %v252
    %301 = vmatpush.bf16.msra.mxu0 %v250
    %302 = vmatpush.bf16.msra.mxu0 %v248
    %303 = vmatpush.bf16.msra.mxu0 %v246
    %304 = vmatpush.bf16.msra.mxu0 %v244
    %305 = vmatpush.bf16.msra.mxu0 %v242
    %306 = vmatpush.bf16.msra.mxu0 %v240
    %307 = vmatpush.bf16.msra.mxu0 %v238
    %308 = vmatmul.bf16.gmra.mxu0 %v87
    %v309 = vpop.f32.mrf.mxu0
    %v310 = vadd.f32 %v296, %v309
    %v311 = vpop.f32.mrf.mxu0
    %v312 = vadd.f32 %v298, %v311
    %313 = vdwg.mxu0
    %314 = vmatpush.bf16.msra.mxu0 %v237
    %315 = vmatpush.bf16.msra.mxu0 %v235
    %316 = vmatpush.bf16.msra.mxu0 %v233
    %317 = vmatpush.bf16.msra.mxu0 %v231
    %318 = vmatpush.bf16.msra.mxu0 %v229
    %319 = vmatpush.bf16.msra.mxu0 %v227
    %320 = vmatpush.bf16.msra.mxu0 %v225
    %321 = vmatpush.bf16.msra.mxu0 %v223
    %322 = vmatmul.bf16.gmra.mxu0 %v86
    %v323 = vpop.f32.mrf.mxu0
    %v324 = vadd.f32 %v123, %v323
    %v325 = vpop.f32.mrf.mxu0
    %v326 = vadd.f32 %v123, %v325
    %327 = vdwg.mxu0
    %328 = vmatpush.bf16.msra.mxu0 %v253
    %329 = vmatpush.bf16.msra.mxu0 %v251
    %330 = vmatpush.bf16.msra.mxu0 %v249
    %331 = vmatpush.bf16.msra.mxu0 %v247
    %332 = vmatpush.bf16.msra.mxu0 %v245
    %333 = vmatpush.bf16.msra.mxu0 %v243
    %334 = vmatpush.bf16.msra.mxu0 %v241
    %335 = vmatpush.bf16.msra.mxu0 %v239
    %336 = vmatmul.bf16.gmra.mxu0 %v87
    %v337 = vpop.f32.mrf.mxu0
    %v338 = vadd.f32 %v324, %v337
    %v339 = vpop.f32.mrf.mxu0
    %v340 = vadd.f32 %v326, %v339
    %341 = vdwg.mxu0
    %v342 = vmul.f32 %v310, 0.5
    %v343 = vmul.f32 %v338, 0.5
    %v344 = vmul.f32 %v312, 0.5
    %v345 = vmul.f32 %v340, 0.5
    %v346 = vmul.f32 %v310, 0.044715
    %v347 = vmul.f32 %v338, 0.044715
    %v348 = vmul.f32 %v312, 0.044715
    %v349 = vmul.f32 %v340, 0.044715
    %v350 = vmul.f32 %v346, %v310
    %v351 = vmul.f32 %v347, %v338
    %v352 = vmul.f32 %v348, %v312
    %v353 = vmul.f32 %v349, %v340
    %v354 = vmul.f32 %v350, %v310
    %v355 = vmul.f32 %v351, %v338
    %v356 = vmul.f32 %v352, %v312
    %v357 = vmul.f32 %v353, %v340
    %v358 = vadd.f32 %v310, %v354
    %v359 = vadd.f32 %v338, %v355
    %v360 = vadd.f32 %v312, %v356
    %v361 = vadd.f32 %v340, %v357
    %v362 = vmul.f32 %v358, 0.7978846
    %v363 = vmul.f32 %v359, 0.7978846
    %v364 = vmul.f32 %v360, 0.7978846
    %v365 = vmul.f32 %v361, 0.7978846
    %v366 = vtanh.pop %v362
    %v367 = vtanh.pop %v363
    %v368 = vtanh.pop %v364
    %v369 = vtanh.pop %v365
    %v370 = vadd.f32 %v366, 1.0
    %v371 = vadd.f32 %v367, 1.0
    %v372 = vadd.f32 %v368, 1.0
    %v373 = vadd.f32 %v369, 1.0
    %v374 = vmul.f32 %v342, %v370
    %v375 = vmul.f32 %v343, %v371
    %v376 = vmul.f32 %v344, %v372
    %v377 = vmul.f32 %v345, %v373
    %v378 = vpack.c.bf16 %v376, %v374
    %v379 = vpack.c.bf16 %v377, %v375
    %v380 = vld [vmem:[#allocation8] sm:$0xff]
    %v381 = vld [vmem:[#allocation8 + $0x8] sm:$0xff]
    %v382 = vld [vmem:[#allocation8 + $0x10] sm:$0xff]
    %v383 = vld [vmem:[#allocation8 + $0x18] sm:$0xff]
    %v384 = vld [vmem:[#allocation8 + $0x20] sm:$0xff]
    %v385 = vld [vmem:[#allocation8 + $0x28] sm:$0xff]
    %v386 = vld [vmem:[#allocation8 + $0x30] sm:$0xff]
    %v387 = vld [vmem:[#allocation8 + $0x38] sm:$0xff]
    %v388 = vld [vmem:[#allocation8 + $0x40] sm:$0xff]
    %v389 = vld [vmem:[#allocation8 + $0x48] sm:$0xff]
    %v390 = vld [vmem:[#allocation8 + $0x50] sm:$0xff]
    %v391 = vld [vmem:[#allocation8 + $0x58] sm:$0xff]
    %v392 = vld [vmem:[#allocation8 + $0x60] sm:$0xff]
    %v393 = vld [vmem:[#allocation8 + $0x68] sm:$0xff]
    %v394 = vld [vmem:[#allocation8 + $0x70] sm:$0xff]
    %v395 = vld [vmem:[#allocation8 + $0x78] sm:$0xff]
    %v396 = vld [vmem:[#allocation8 + $0x80] sm:$0xff]
    %v397 = vld [vmem:[#allocation8 + $0x88] sm:$0xff]
    %v398 = vld [vmem:[#allocation8 + $0x90] sm:$0xff]
    %v399 = vld [vmem:[#allocation8 + $0x98] sm:$0xff]
    %v400 = vld [vmem:[#allocation8 + $0xa0] sm:$0xff]
    %v401 = vld [vmem:[#allocation8 + $0xa8] sm:$0xff]
    %v402 = vld [vmem:[#allocation8 + $0xb0] sm:$0xff]
    %v403 = vld [vmem:[#allocation8 + $0xb8] sm:$0xff]
    %v404 = vld [vmem:[#allocation8 + $0xc0] sm:$0xff]
    %v405 = vld [vmem:[#allocation8 + $0xc8] sm:$0xff]
    %v406 = vld [vmem:[#allocation8 + $0xd0] sm:$0xff]
    %v407 = vld [vmem:[#allocation8 + $0xd8] sm:$0xff]
    %v408 = vld [vmem:[#allocation8 + $0xe0] sm:$0xff]
    %v409 = vld [vmem:[#allocation8 + $0xe8] sm:$0xff]
    %v410 = vld [vmem:[#allocation8 + $0xf0] sm:$0xff]
    %v411 = vld [vmem:[#allocation8 + $0xf8] sm:$0xff]
    %v412 = vld [vmem:[%s4] sm:$0x3]
    %v414 = vperm.slane %v412, 0
    %v415 = vperm.slane %v412, 1
    %v450 = vunpack.c.l.b16 %v380
    %v451 = vunpack.c.h.b16 %v380
    %v452 = vunpack.c.l.b16 %v381
    %v453 = vunpack.c.h.b16 %v381
    %v454 = vunpack.c.l.b16 %v382
    %v455 = vunpack.c.h.b16 %v382
    %v456 = vunpack.c.l.b16 %v383
    %v457 = vunpack.c.h.b16 %v383
    %v458 = vunpack.c.l.b16 %v384
    %v459 = vunpack.c.h.b16 %v384
    %v460 = vunpack.c.l.b16 %v385
    %v461 = vunpack.c.h.b16 %v385
    %v462 = vunpack.c.l.b16 %v386
    %v463 = vunpack.c.h.b16 %v386
    %v464 = vunpack.c.l.b16 %v387
    %v465 = vunpack.c.h.b16 %v387
    %v466 = vunpack.c.l.b16 %v388
    %v467 = vunpack.c.h.b16 %v388
    %v468 = vunpack.c.l.b16 %v389
    %v469 = vunpack.c.h.b16 %v389
    %v470 = vunpack.c.l.b16 %v390
    %v471 = vunpack.c.h.b16 %v390
    %v472 = vunpack.c.l.b16 %v391
    %v473 = vunpack.c.h.b16 %v391
    %v474 = vunpack.c.l.b16 %v392
    %v475 = vunpack.c.h.b16 %v392
    %v476 = vunpack.c.l.b16 %v393
    %v477 = vunpack.c.h.b16 %v393
    %v478 = vunpack.c.l.b16 %v394
    %v479 = vunpack.c.h.b16 %v394
    %v480 = vunpack.c.l.b16 %v395
    %v481 = vunpack.c.h.b16 %v395
    %v482 = vunpack.c.l.b16 %v396
    %v483 = vunpack.c.h.b16 %v396
    %v484 = vunpack.c.l.b16 %v397
    %v485 = vunpack.c.h.b16 %v397
    %v486 = vunpack.c.l.b16 %v398
    %v487 = vunpack.c.h.b16 %v398
    %v488 = vunpack.c.l.b16 %v399
    %v489 = vunpack.c.h.b16 %v399
    %v490 = vunpack.c.l.b16 %v400
    %v491 = vunpack.c.h.b16 %v400
    %v492 = vunpack.c.l.b16 %v401
    %v493 = vunpack.c.h.b16 %v401
    %v494 = vunpack.c.l.b16 %v402
    %v495 = vunpack.c.h.b16 %v402
    %v496 = vunpack.c.l.b16 %v403
    %v497 = vunpack.c.h.b16 %v403
    %v498 = vunpack.c.l.b16 %v404
    %v499 = vunpack.c.h.b16 %v404
    %v500 = vunpack.c.l.b16 %v405
    %v501 = vunpack.c.h.b16 %v405
    %v502 = vunpack.c.l.b16 %v406
    %v503 = vunpack.c.h.b16 %v406
    %v504 = vunpack.c.l.b16 %v407
    %v505 = vunpack.c.h.b16 %v407
    %v506 = vunpack.c.l.b16 %v408
    %v507 = vunpack.c.h.b16 %v408
    %v508 = vunpack.c.l.b16 %v409
    %v509 = vunpack.c.h.b16 %v409
    %v510 = vunpack.c.l.b16 %v410
    %v511 = vunpack.c.h.b16 %v410
    %v512 = vunpack.c.l.b16 %v411
    %v513 = vunpack.c.h.b16 %v411
    %v514 = vpack.c.b16 %v452, %v450
    %v515 = vpack.c.b16 %v453, %v451
    %v516 = vpack.c.b16 %v456, %v454
    %v517 = vpack.c.b16 %v457, %v455
    %v518 = vpack.c.b16 %v460, %v458
    %v519 = vpack.c.b16 %v461, %v459
    %v520 = vpack.c.b16 %v464, %v462
    %v521 = vpack.c.b16 %v465, %v463
    %v522 = vpack.c.b16 %v468, %v466
    %v523 = vpack.c.b16 %v469, %v467
    %v524 = vpack.c.b16 %v472, %v470
    %v525 = vpack.c.b16 %v473, %v471
    %v526 = vpack.c.b16 %v476, %v474
    %v527 = vpack.c.b16 %v477, %v475
    %v528 = vpack.c.b16 %v480, %v478
    %v529 = vpack.c.b16 %v481, %v479
    %v530 = vpack.c.b16 %v484, %v482
    %v531 = vpack.c.b16 %v485, %v483
    %v532 = vpack.c.b16 %v488, %v486
    %v533 = vpack.c.b16 %v489, %v487
    %v534 = vpack.c.b16 %v492, %v490
    %v535 = vpack.c.b16 %v493, %v491
    %v536 = vpack.c.b16 %v496, %v494
    %v537 = vpack.c.b16 %v497, %v495
    %v538 = vpack.c.b16 %v500, %v498
    %v539 = vpack.c.b16 %v501, %v499
    %v540 = vpack.c.b16 %v504, %v502
    %v541 = vpack.c.b16 %v505, %v503
    %v542 = vpack.c.b16 %v508, %v506
    %v543 = vpack.c.b16 %v509, %v507
    %v544 = vpack.c.b16 %v512, %v510
    %v545 = vpack.c.b16 %v513, %v511
    %578 = vmatpush.bf16.msra.mxu0 %v528
    %579 = vmatpush.bf16.msra.mxu0 %v526
    %580 = vmatpush.bf16.msra.mxu0 %v524
    %581 = vmatpush.bf16.msra.mxu0 %v522
    %582 = vmatpush.bf16.msra.mxu0 %v520
    %583 = vmatpush.bf16.msra.mxu0 %v518
    %584 = vmatpush.bf16.msra.mxu0 %v516
    %585 = vmatpush.bf16.msra.mxu0 %v514
    %586 = vmatmul.bf16.gmra.mxu0 %v378
    %v587 = vpop.f32.mrf.mxu0
    %v588 = vadd.f32 %v414, %v587
    %v589 = vpop.f32.mrf.mxu0
    %v590 = vadd.f32 %v414, %v589
    %591 = vdwg.mxu0
    %592 = vmatpush.bf16.msra.mxu0 %v544
    %593 = vmatpush.bf16.msra.mxu0 %v542
    %594 = vmatpush.bf16.msra.mxu0 %v540
    %595 = vmatpush.bf16.msra.mxu0 %v538
    %596 = vmatpush.bf16.msra.mxu0 %v536
    %597 = vmatpush.bf16.msra.mxu0 %v534
    %598 = vmatpush.bf16.msra.mxu0 %v532
    %599 = vmatpush.bf16.msra.mxu0 %v530
    %600 = vmatmul.bf16.gmra.mxu0 %v379
    %v601 = vpop.f32.mrf.mxu0
    %v602 = vadd.f32 %v588, %v601
    %v603 = vpop.f32.mrf.mxu0
    %v604 = vadd.f32 %v590, %v603
    %605 = vdwg.mxu0
    %606 = vmatpush.bf16.msra.mxu0 %v529
    %607 = vmatpush.bf16.msra.mxu0 %v527
    %608 = vmatpush.bf16.msra.mxu0 %v525
    %609 = vmatpush.bf16.msra.mxu0 %v523
    %610 = vmatpush.bf16.msra.mxu0 %v521
    %611 = vmatpush.bf16.msra.mxu0 %v519
    %612 = vmatpush.bf16.msra.mxu0 %v517
    %613 = vmatpush.bf16.msra.mxu0 %v515
    %614 = vmatmul.bf16.gmra.mxu0 %v378
    %v615 = vpop.f32.mrf.mxu0
    %v616 = vadd.f32 %v415, %v615
    %v617 = vpop.f32.mrf.mxu0
    %v618 = vadd.f32 %v415, %v617
    %619 = vdwg.mxu0
    %620 = vmatpush.bf16.msra.mxu0 %v545
    %621 = vmatpush.bf16.msra.mxu0 %v543
    %622 = vmatpush.bf16.msra.mxu0 %v541
    %623 = vmatpush.bf16.msra.mxu0 %v539
    %624 = vmatpush.bf16.msra.mxu0 %v537
    %625 = vmatpush.bf16.msra.mxu0 %v535
    %626 = vmatpush.bf16.msra.mxu0 %v533
    %627 = vmatpush.bf16.msra.mxu0 %v531
    %628 = vmatmul.bf16.gmra.mxu0 %v379
    %v629 = vpop.f32.mrf.mxu0
    %v630 = vadd.f32 %v616, %v629
    %v631 = vpop.f32.mrf.mxu0
    %v632 = vadd.f32 %v618, %v631
    %633 = vdwg.mxu0
    %v634 = vmul.f32 %v602, %v602
    %v635 = vmul.f32 %v630, %v630
    %v636 = vmul.f32 %v604, %v604
    %v637 = vmul.f32 %v632, %v632
    %v638 = vadd.f32 %v634, %v635
    %639 = vadd.xlane.f32.xlu0 %v638
    %v640 = vpop.xlane.xlu0 %639
    %v641 = vadd.f32 %v636, %v637
    %642 = vadd.xlane.f32.xlu0 %v641
    %v643 = vpop.xlane.xlu0 %642
    %v644 = vmax.f32 %v640, 1e-24
    %v645 = vmax.f32 %v643, 1e-24
    %v646 = vrsqrt.pop %v644
    %v647 = vmul.f32 %v646, %v644
    %v648 = vmul.f32 %v647, %v646
    %v649 = vmul.f32 0.5, %v648
    %v650 = vsub.f32 1.5, %v649
    %v651 = vmul.f32 %v646, %v650
    %vm652 = vweird.f32 %v644
    %vm653 = vweird.f32 %v646
    %vm654 = vmor %vm652, %vm653
    %v655 = vsel %vm654, %v646, %v651
    %v656 = vrsqrt.pop %v645
    %v657 = vmul.f32 %v656, %v645
    %v658 = vmul.f32 %v657, %v656
    %v659 = vmul.f32 0.5, %v658
    %v660 = vsub.f32 1.5, %v659
    %v661 = vmul.f32 %v656, %v660
    %vm662 = vweird.f32 %v645
    %vm663 = vweird.f32 %v656
    %vm664 = vmor %vm662, %vm663
    %v665 = vsel %vm664, %v656, %v661
    %v666 = vmul.f32 %v602, %v655
    %v667 = vmul.f32 %v630, %v655
    %v668 = vmul.f32 %v604, %v665
    %v669 = vmul.f32 %v632, %v665
    %670 = vst [vmem:[#allocation10] sm:$0xff] %v666
    %671 = vst [vmem:[#allocation10 + $0x8] sm:$0xff] %v667
    %672 = vst [vmem:[#allocation10 + $0x10] sm:$0xff] %v668
    %673 = vst [vmem:[#allocation10 + $0x18] sm:$0xff] %v669
    // Predicated region
    $region38: #{tpu_custom_call.1} parent=1 // pred_check
      _
    $region39: #{tpu_custom_call.1} parent=1 // pred_check_branch
      %675 = sbr.rel (0) target = $region41
    $region40: #{tpu_custom_call.1} parent=1 // pred_region
      %677 = vsyncadd [#allocation4], 0
      %s678 = sshll.u32 [#allocation10], 4
      %s679 = int_to_ptr.vmem [resolvable:$true] %s678
      %s680 = sshll.u32 %s5, 4
      %s681 = int_to_ptr.hbm [resolvable:$true] %s680
      %686 = dma.vmem_to_hbm [thread:$0]  %s679, 512, %s681, [#allocation4], 256, 256, 16
    $region41: #{tpu_custom_call.1} parent=1 // pred_fallthru
      _
    // Predicated region
    $region42: #{tpu_custom_call.1} parent=1 // pred_check
      _
    $region43: #{tpu_custom_call.1} parent=1 // pred_check_branch
      %688 = sbr.rel (0) target = $region45
    $region44: #{tpu_custom_call.1} parent=1 // pred_region
      %690 = dma.done [#allocation4], 512
    $region45: #{tpu_custom_call.1} parent=1 // pred_fallthru
      _
    %691 = vsyncpa [#allocation3], 1
    %692 = vsyncpa [#allocation6], 1
    %693 = vsyncpa [#allocation9], 1
    %694 = vsyncpa [#allocation4], 1

// kernel: tpu_custom_call.1
$region0: #{tpu_custom_call.1}
  #allocation0 [shape = 'u32[]', space=smem, size = 0x4, offset = 0x4, fixed_abs, tag = 'smem constant byte address 0x4 - core index']
  #allocation1 [shape = 'u32[72,128]{1,0:T(1,128)}', space=vmem, size = 0x9000, scoped, tag = 'internal scratch']
  %s0 = inlined_call_operand.hbm [shape: f32[16,256], index: 0, kind: input, shape index: {}]
  %s1 = inlined_call_operand.hbm [shape: bf16[256,256], index: 1, kind: input, shape index: {}]
  %s2 = inlined_call_operand.hbm [shape: f32[1,256], index: 2, kind: input, shape index: {}]
  %s3 = inlined_call_operand.hbm [shape: bf16[256,256], index: 3, kind: input, shape index: {}]
  %s4 = inlined_call_operand.vmem [shape: f32[1,256], index: 4, kind: input, shape index: {}]
  %s5 = inlined_call_operand.hbm [shape: f32[16,256], index: 5, kind: output, shape index: {}]
  %s6 = sld [smem:[#allocation0]]
  $region46: #{tpu_custom_call.1} parent=0
    _
  %s8 = ssub.s32 1, %s6
  %s9 = scalar_select 0, %s8, %s6
  $region1: #{tpu_custom_call.1} parent=0
    #allocation2 [shape = 'u8[16384]{0}', space=vmem, size = 0x4000, scoped, tag = 'input window, operand 0, single buffered']
    #allocation3 [shape = 's32[1]{0}', space=sflag, size = 0x4, scoped, tag = 'scoped memory for tpu_custom_call.1']
    #allocation4 [shape = 's32[1]{0}', space=sflag, size = 0x4, scoped, tag = 'scoped memory for tpu_custom_call.1']
    #allocation5 [shape = 'u8[131072]{0}', space=vmem, size = 0x20000, scoped, tag = 'input window, operand 1, single buffered']
    #allocation6 [shape = 's32[1]{0}', space=sflag, size = 0x4, scoped, tag = 'scoped memory for tpu_custom_call.1']
    #allocation7 [shape = 'u8[1024]{0}', space=vmem, size = 0x400, scoped, tag = 'input window, operand 2, single buffered']
    #allocation8 [shape = 'u8[131072]{0}', space=vmem, size = 0x20000, scoped, tag = 'input window, operand 3, single buffered']
    #allocation9 [shape = 's32[1]{0}', space=sflag, size = 0x4, scoped, tag = 'scoped memory for tpu_custom_call.1']
    #allocation10 [shape = 'u8[16384]{0}', space=vmem, size = 0x4000, scoped, tag = 'output window, operand 0, single buffered']
    %10 = vsyncpa [#allocation3], 0
    %11 = vsyncpa [#allocation6], 0
    %12 = vsyncpa [#allocation9], 0
    %13 = vsyncpa [#allocation4], 0
    // Predicated region
    $region2: #{tpu_custom_call.1} parent=1 // pred_check
      _
    $region3: #{tpu_custom_call.1} parent=1 // pred_check_branch
      %15 = sbr.rel (0) target = $region5
    $region4: #{tpu_custom_call.1} parent=1 // pred_region
      %17 = vsyncadd [#allocation3], 0
      %s18 = sshll.u32 %s0, 4
      %s19 = int_to_ptr.hbm [resolvable:$true] %s18
      %s20 = sshll.u32 [#allocation2], 4
      %s21 = int_to_ptr.vmem [resolvable:$true] %s20
      %26 = dma.hbm_to_vmem [thread:$0]  %s19, 512, %s21, [#allocation3], 256, 256, 16
    $region5: #{tpu_custom_call.1} parent=1 // pred_fallthru
      _
    // Predicated region
    $region6: #{tpu_custom_call.1} parent=1 // pred_check
      _
    $region7: #{tpu_custom_call.1} parent=1 // pred_check_branch
      %28 = sbr.rel (0) target = $region9
    $region8: #{tpu_custom_call.1} parent=1 // pred_region
      %30 = vsyncadd [#allocation6], 0
      %s31 = sshll.u32 %s1, 4
      %s32 = int_to_ptr.hbm [resolvable:$true] %s31
      %s33 = sshll.u32 [#allocation5], 4
      %s34 = int_to_ptr.vmem [resolvable:$true] %s33
      %39 = dma.hbm_to_vmem [thread:$0]  %s32, 4096, %s34, [#allocation6], 128, 128, 8
    $region9: #{tpu_custom_call.1} parent=1 // pred_fallthru
      _
    // Predicated region
    $region10: #{tpu_custom_call.1} parent=1 // pred_check
      _
    $region11: #{tpu_custom_call.1} parent=1 // pred_check_branch
      %41 = sbr.rel (0) target = $region13
    $region12: #{tpu_custom_call.1} parent=1 // pred_region
      %43 = vsyncadd [#allocation6], 0
      %s45 = sshll.u32 %s2, 4
      %s46 = int_to_ptr.hbm [resolvable:$true] %s45
      %s47 = sshll.u32 [#allocation7], 4
      %s48 = int_to_ptr.vmem [resolvable:$true] %s47
      %50 = dma.hbm_to_vmem [thread:$0]  %s46, 32, %s48, [#allocation6]
    $region13: #{tpu_custom_call.1} parent=1 // pred_fallthru
      _
    // Predicated region
    $region14: #{tpu_custom_call.1} parent=1 // pred_check
      _
    $region15: #{tpu_custom_call.1} parent=1 // pred_check_branch
      %52 = sbr.rel (0) target = $region17
    $region16: #{tpu_custom_call.1} parent=1 // pred_region
      %54 = vsyncadd [#allocation9], 0
      %s55 = sshll.u32 %s3, 4
      %s56 = int_to_ptr.hbm [resolvable:$true] %s55
      %s57 = sshll.u32 [#allocation8], 4
      %s58 = int_to_ptr.vmem [resolvable:$true] %s57
      %63 = dma.hbm_to_vmem [thread:$0]  %s56, 4096, %s58, [#allocation9], 128, 128, 8
    $region17: #{tpu_custom_call.1} parent=1 // pred_fallthru
      _
    // Predicated region
    $region18: #{tpu_custom_call.1} parent=1 // pred_check
      _
    $region19: #{tpu_custom_call.1} parent=1 // pred_check_branch
      %65 = sbr.rel (0) target = $region21
    $region20: #{tpu_custom_call.1} parent=1 // pred_region
      _
    $region21: #{tpu_custom_call.1} parent=1 // pred_fallthru
      _
    // Predicated region
    $region22: #{tpu_custom_call.1} parent=1 // pred_check
      _
    $region23: #{tpu_custom_call.1} parent=1 // pred_check_branch
      %67 = sbr.rel (0) target = $region25
    $region24: #{tpu_custom_call.1} parent=1 // pred_region
      %69 = dma.done [#allocation3], 512
    $region25: #{tpu_custom_call.1} parent=1 // pred_fallthru
      _
    // Predicated region
    $region26: #{tpu_custom_call.1} parent=1 // pred_check
      _
    $region27: #{tpu_custom_call.1} parent=1 // pred_check_branch
      %71 = sbr.rel (0) target = $region29
    $region28: #{tpu_custom_call.1} parent=1 // pred_region
      %73 = dma.done [#allocation6], 4096
    $region29: #{tpu_custom_call.1} parent=1 // pred_fallthru
      _
    // Predicated region
    $region30: #{tpu_custom_call.1} parent=1 // pred_check
      _
    $region31: #{tpu_custom_call.1} parent=1 // pred_check_branch
      %75 = sbr.rel (0) target = $region33
    $region32: #{tpu_custom_call.1} parent=1 // pred_region
      %77 = dma.done [#allocation6], 32
    $region33: #{tpu_custom_call.1} parent=1 // pred_fallthru
      _
    // Predicated region
    $region34: #{tpu_custom_call.1} parent=1 // pred_check
      _
    $region35: #{tpu_custom_call.1} parent=1 // pred_check_branch
      %79 = sbr.rel (0) target = $region37
    $region36: #{tpu_custom_call.1} parent=1 // pred_region
      %81 = dma.done [#allocation9], 4096
    $region37: #{tpu_custom_call.1} parent=1 // pred_fallthru
      _
    %v82 = vld [vmem:[#allocation2] sm:$0xff]
    %v83 = vld [vmem:[#allocation2 + $0x8] sm:$0xff]
    %v84 = vld [vmem:[#allocation2 + $0x10] sm:$0xff]
    %v85 = vld [vmem:[#allocation2 + $0x18] sm:$0xff]
    %v86 = vpack.c.bf16 %v84, %v82
    %v87 = vpack.c.bf16 %v85, %v83
    %v88 = vld [vmem:[#allocation5] sm:$0xff]
    %v89 = vld [vmem:[#allocation5 + $0x8] sm:$0xff]
    %v90 = vld [vmem:[#allocation5 + $0x10] sm:$0xff]
    %v91 = vld [vmem:[#allocation5 + $0x18] sm:$0xff]
    %v92 = vld [vmem:[#allocation5 + $0x20] sm:$0xff]
    %v93 = vld [vmem:[#allocation5 + $0x28] sm:$0xff]
    %v94 = vld [vmem:[#allocation5 + $0x30] sm:$0xff]
    %v95 = vld [vmem:[#allocation5 + $0x38] sm:$0xff]
    %v96 = vld [vmem:[#allocation5 + $0x40] sm:$0xff]
    %v97 = vld [vmem:[#allocation5 + $0x48] sm:$0xff]
    %v98 = vld [vmem:[#allocation5 + $0x50] sm:$0xff]
    %v99 = vld [vmem:[#allocation5 + $0x58] sm:$0xff]
    %v100 = vld [vmem:[#allocation5 + $0x60] sm:$0xff]
    %v101 = vld [vmem:[#allocation5 + $0x68] sm:$0xff]
    %v102 = vld [vmem:[#allocation5 + $0x70] sm:$0xff]
    %v103 = vld [vmem:[#allocation5 + $0x78] sm:$0xff]
    %v104 = vld [vmem:[#allocation5 + $0x80] sm:$0xff]
    %v105 = vld [vmem:[#allocation5 + $0x88] sm:$0xff]
    %v106 = vld [vmem:[#allocation5 + $0x90] sm:$0xff]
    %v107 = vld [vmem:[#allocation5 + $0x98] sm:$0xff]
    %v108 = vld [vmem:[#allocation5 + $0xa0] sm:$0xff]
    %v109 = vld [vmem:[#allocation5 + $0xa8] sm:$0xff]
    %v110 = vld [vmem:[#allocation5 + $0xb0] sm:$0xff]
    %v111 = vld [vmem:[#allocation5 + $0xb8] sm:$0xff]
    %v112 = vld [vmem:[#allocation5 + $0xc0] sm:$0xff]
    %v113 = vld [vmem:[#allocation5 + $0xc8] sm:$0xff]
    %v114 = vld [vmem:[#allocation5 + $0xd0] sm:$0xff]
    %v115 = vld [vmem:[#allocation5 + $0xd8] sm:$0xff]
    %v116 = vld [vmem:[#allocation5 + $0xe0] sm:$0xff]
    %v117 = vld [vmem:[#allocation5 + $0xe8] sm:$0xff]
    %v118 = vld [vmem:[#allocation5 + $0xf0] sm:$0xff]
    %v119 = vld [vmem:[#allocation5 + $0xf8] sm:$0xff]
    %v120 = vld [vmem:[#allocation7] sm:$0x3]
    %v122 = vperm.slane %v120, 0
    %v123 = vperm.slane %v120, 1
    %v158 = vunpack.c.l.b16 %v88
    %v159 = vunpack.c.h.b16 %v88
    %v160 = vunpack.c.l.b16 %v89
    %v161 = vunpack.c.h.b16 %v89
    %v162 = vunpack.c.l.b16 %v90
    %v163 = vunpack.c.h.b16 %v90
    %v164 = vunpack.c.l.b16 %v91
    %v165 = vunpack.c.h.b16 %v91
    %v166 = vunpack.c.l.b16 %v92
    %v167 = vunpack.c.h.b16 %v92
    %v168 = vunpack.c.l.b16 %v93
    %v169 = vunpack.c.h.b16 %v93
    %v170 = vunpack.c.l.b16 %v94
    %v171 = vunpack.c.h.b16 %v94
    %v172 = vunpack.c.l.b16 %v95
    %v173 = vunpack.c.h.b16 %v95
    %v174 = vunpack.c.l.b16 %v96
    %v175 = vunpack.c.h.b16 %v96
    %v176 = vunpack.c.l.b16 %v97
    %v177 = vunpack.c.h.b16 %v97
    %v178 = vunpack.c.l.b16 %v98
    %v179 = vunpack.c.h.b16 %v98
    %v180 = vunpack.c.l.b16 %v99
    %v181 = vunpack.c.h.b16 %v99
    %v182 = vunpack.c.l.b16 %v100
    %v183 = vunpack.c.h.b16 %v100
    %v184 = vunpack.c.l.b16 %v101
    %v185 = vunpack.c.h.b16 %v101
    %v186 = vunpack.c.l.b16 %v102
    %v187 = vunpack.c.h.b16 %v102
    %v188 = vunpack.c.l.b16 %v103
    %v189 = vunpack.c.h.b16 %v103
    %v190 = vunpack.c.l.b16 %v104
    %v191 = vunpack.c.h.b16 %v104
    %v192 = vunpack.c.l.b16 %v105
    %v193 = vunpack.c.h.b16 %v105
    %v194 = vunpack.c.l.b16 %v106
    %v195 = vunpack.c.h.b16 %v106
    %v196 = vunpack.c.l.b16 %v107
    %v197 = vunpack.c.h.b16 %v107
    %v198 = vunpack.c.l.b16 %v108
    %v199 = vunpack.c.h.b16 %v108
    %v200 = vunpack.c.l.b16 %v109
    %v201 = vunpack.c.h.b16 %v109
    %v202 = vunpack.c.l.b16 %v110
    %v203 = vunpack.c.h.b16 %v110
    %v204 = vunpack.c.l.b16 %v111
    %v205 = vunpack.c.h.b16 %v111
    %v206 = vunpack.c.l.b16 %v112
    %v207 = vunpack.c.h.b16 %v112
    %v208 = vunpack.c.l.b16 %v113
    %v209 = vunpack.c.h.b16 %v113
    %v210 = vunpack.c.l.b16 %v114
    %v211 = vunpack.c.h.b16 %v114
    %v212 = vunpack.c.l.b16 %v115
    %v213 = vunpack.c.h.b16 %v115
    %v214 = vunpack.c.l.b16 %v116
    %v215 = vunpack.c.h.b16 %v116
    %v216 = vunpack.c.l.b16 %v117
    %v217 = vunpack.c.h.b16 %v117
    %v218 = vunpack.c.l.b16 %v118
    %v219 = vunpack.c.h.b16 %v118
    %v220 = vunpack.c.l.b16 %v119
    %v221 = vunpack.c.h.b16 %v119
    %v222 = vpack.c.b16 %v160, %v158
    %v223 = vpack.c.b16 %v161, %v159
    %v224 = vpack.c.b16 %v164, %v162
    %v225 = vpack.c.b16 %v165, %v163
    %v226 = vpack.c.b16 %v168, %v166
    %v227 = vpack.c.b16 %v169, %v167
    %v228 = vpack.c.b16 %v172, %v170
    %v229 = vpack.c.b16 %v173, %v171
    %v230 = vpack.c.b16 %v176, %v174
    %v231 = vpack.c.b16 %v177, %v175
    %v232 = vpack.c.b16 %v180, %v178
    %v233 = vpack.c.b16 %v181, %v179
    %v234 = vpack.c.b16 %v184, %v182
    %v235 = vpack.c.b16 %v185, %v183
    %v236 = vpack.c.b16 %v188, %v186
    %v237 = vpack.c.b16 %v189, %v187
    %v238 = vpack.c.b16 %v192, %v190
    %v239 = vpack.c.b16 %v193, %v191
    %v240 = vpack.c.b16 %v196, %v194
    %v241 = vpack.c.b16 %v197, %v195
    %v242 = vpack.c.b16 %v200, %v198
    %v243 = vpack.c.b16 %v201, %v199
    %v244 = vpack.c.b16 %v204, %v202
    %v245 = vpack.c.b16 %v205, %v203
    %v246 = vpack.c.b16 %v208, %v206
    %v247 = vpack.c.b16 %v209, %v207
    %v248 = vpack.c.b16 %v212, %v210
    %v249 = vpack.c.b16 %v213, %v211
    %v250 = vpack.c.b16 %v216, %v214
    %v251 = vpack.c.b16 %v217, %v215
    %v252 = vpack.c.b16 %v220, %v218
    %v253 = vpack.c.b16 %v221, %v219
    %286 = vmatpush.bf16.msra.mxu0 %v236
    %287 = vmatpush.bf16.msra.mxu0 %v234
    %288 = vmatpush.bf16.msra.mxu0 %v232
    %289 = vmatpush.bf16.msra.mxu0 %v230
    %290 = vmatpush.bf16.msra.mxu0 %v228
    %291 = vmatpush.bf16.msra.mxu0 %v226
    %292 = vmatpush.bf16.msra.mxu0 %v224
    %293 = vmatpush.bf16.msra.mxu0 %v222
    %294 = vmatmul.bf16.gmra.mxu0 %v86
    %v295 = vpop.f32.mrf.mxu0
    %v296 = vadd.f32 %v122, %v295
    %v297 = vpop.f32.mrf.mxu0
    %v298 = vadd.f32 %v122, %v297
    %299 = vdwg.mxu0
    %300 = vmatpush.bf16.msra.mxu0 %v252
    %301 = vmatpush.bf16.msra.mxu0 %v250
    %302 = vmatpush.bf16.msra.mxu0 %v248
    %303 = vmatpush.bf16.msra.mxu0 %v246
    %304 = vmatpush.bf16.msra.mxu0 %v244
    %305 = vmatpush.bf16.msra.mxu0 %v242
    %306 = vmatpush.bf16.msra.mxu0 %v240
    %307 = vmatpush.bf16.msra.mxu0 %v238
    %308 = vmatmul.bf16.gmra.mxu0 %v87
    %v309 = vpop.f32.mrf.mxu0
    %v310 = vadd.f32 %v296, %v309
    %v311 = vpop.f32.mrf.mxu0
    %v312 = vadd.f32 %v298, %v311
    %313 = vdwg.mxu0
    %314 = vmatpush.bf16.msra.mxu0 %v237
    %315 = vmatpush.bf16.msra.mxu0 %v235
    %316 = vmatpush.bf16.msra.mxu0 %v233
    %317 = vmatpush.bf16.msra.mxu0 %v231
    %318 = vmatpush.bf16.msra.mxu0 %v229
    %319 = vmatpush.bf16.msra.mxu0 %v227
    %320 = vmatpush.bf16.msra.mxu0 %v225
    %321 = vmatpush.bf16.msra.mxu0 %v223
    %322 = vmatmul.bf16.gmra.mxu0 %v86
    %v323 = vpop.f32.mrf.mxu0
    %v324 = vadd.f32 %v123, %v323
    %v325 = vpop.f32.mrf.mxu0
    %v326 = vadd.f32 %v123, %v325
    %327 = vdwg.mxu0
    %328 = vmatpush.bf16.msra.mxu0 %v253
    %329 = vmatpush.bf16.msra.mxu0 %v251
    %330 = vmatpush.bf16.msra.mxu0 %v249
    %331 = vmatpush.bf16.msra.mxu0 %v247
    %332 = vmatpush.bf16.msra.mxu0 %v245
    %333 = vmatpush.bf16.msra.mxu0 %v243
    %334 = vmatpush.bf16.msra.mxu0 %v241
    %335 = vmatpush.bf16.msra.mxu0 %v239
    %336 = vmatmul.bf16.gmra.mxu0 %v87
    %v337 = vpop.f32.mrf.mxu0
    %v338 = vadd.f32 %v324, %v337
    %v339 = vpop.f32.mrf.mxu0
    %v340 = vadd.f32 %v326, %v339
    %341 = vdwg.mxu0
    %v342 = vmul.f32 %v310, 0.5
    %v343 = vmul.f32 %v338, 0.5
    %v344 = vmul.f32 %v312, 0.5
    %v345 = vmul.f32 %v340, 0.5
    %v346 = vmul.f32 %v310, 0.044715
    %v347 = vmul.f32 %v338, 0.044715
    %v348 = vmul.f32 %v312, 0.044715
    %v349 = vmul.f32 %v340, 0.044715
    %v350 = vmul.f32 %v346, %v310
    %v351 = vmul.f32 %v347, %v338
    %v352 = vmul.f32 %v348, %v312
    %v353 = vmul.f32 %v349, %v340
    %v354 = vmul.f32 %v350, %v310
    %v355 = vmul.f32 %v351, %v338
    %v356 = vmul.f32 %v352, %v312
    %v357 = vmul.f32 %v353, %v340
    %v358 = vadd.f32 %v310, %v354
    %v359 = vadd.f32 %v338, %v355
    %v360 = vadd.f32 %v312, %v356
    %v361 = vadd.f32 %v340, %v357
    %v362 = vmul.f32 %v358, 0.7978846
    %v363 = vmul.f32 %v359, 0.7978846
    %v364 = vmul.f32 %v360, 0.7978846
    %v365 = vmul.f32 %v361, 0.7978846
    %v366 = vtanh.pop %v362
    %v367 = vtanh.pop %v363
    %v368 = vtanh.pop %v364
    %v369 = vtanh.pop %v365
    %v370 = vadd.f32 %v366, 1.0
    %v371 = vadd.f32 %v367, 1.0
    %v372 = vadd.f32 %v368, 1.0
    %v373 = vadd.f32 %v369, 1.0
    %v374 = vmul.f32 %v342, %v370
    %v375 = vmul.f32 %v343, %v371
    %v376 = vmul.f32 %v344, %v372
    %v377 = vmul.f32 %v345, %v373
    %v378 = vpack.c.bf16 %v376, %v374
    %v379 = vpack.c.bf16 %v377, %v375
    %v380 = vld [vmem:[#allocation8] sm:$0xff]
    %v381 = vld [vmem:[#allocation8 + $0x8] sm:$0xff]
    %v382 = vld [vmem:[#allocation8 + $0x10] sm:$0xff]
    %v383 = vld [vmem:[#allocation8 + $0x18] sm:$0xff]
    %v384 = vld [vmem:[#allocation8 + $0x20] sm:$0xff]
    %v385 = vld [vmem:[#allocation8 + $0x28] sm:$0xff]
    %v386 = vld [vmem:[#allocation8 + $0x30] sm:$0xff]
    %v387 = vld [vmem:[#allocation8 + $0x38] sm:$0xff]
    %v388 = vld [vmem:[#allocation8 + $0x40] sm:$0xff]
    %v389 = vld [vmem:[#allocation8 + $0x48] sm:$0xff]
    %v390 = vld [vmem:[#allocation8 + $0x50] sm:$0xff]
    %v391 = vld [vmem:[#allocation8 + $0x58] sm:$0xff]
    %v392 = vld [vmem:[#allocation8 + $0x60] sm:$0xff]
    %v393 = vld [vmem:[#allocation8 + $0x68] sm:$0xff]
    %v394 = vld [vmem:[#allocation8 + $0x70] sm:$0xff]
    %v395 = vld [vmem:[#allocation8 + $0x78] sm:$0xff]
    %v396 = vld [vmem:[#allocation8 + $0x80] sm:$0xff]
    %v397 = vld [vmem:[#allocation8 + $0x88] sm:$0xff]
    %v398 = vld [vmem:[#allocation8 + $0x90] sm:$0xff]
    %v399 = vld [vmem:[#allocation8 + $0x98] sm:$0xff]
    %v400 = vld [vmem:[#allocation8 + $0xa0] sm:$0xff]
    %v401 = vld [vmem:[#allocation8 + $0xa8] sm:$0xff]
    %v402 = vld [vmem:[#allocation8 + $0xb0] sm:$0xff]
    %v403 = vld [vmem:[#allocation8 + $0xb8] sm:$0xff]
    %v404 = vld [vmem:[#allocation8 + $0xc0] sm:$0xff]
    %v405 = vld [vmem:[#allocation8 + $0xc8] sm:$0xff]
    %v406 = vld [vmem:[#allocation8 + $0xd0] sm:$0xff]
    %v407 = vld [vmem:[#allocation8 + $0xd8] sm:$0xff]
    %v408 = vld [vmem:[#allocation8 + $0xe0] sm:$0xff]
    %v409 = vld [vmem:[#allocation8 + $0xe8] sm:$0xff]
    %v410 = vld [vmem:[#allocation8 + $0xf0] sm:$0xff]
    %v411 = vld [vmem:[#allocation8 + $0xf8] sm:$0xff]
    %v412 = vld [vmem:[%s4] sm:$0x3]
    %v414 = vperm.slane %v412, 0
    %v415 = vperm.slane %v412, 1
    %v450 = vunpack.c.l.b16 %v380
    %v451 = vunpack.c.h.b16 %v380
    %v452 = vunpack.c.l.b16 %v381
    %v453 = vunpack.c.h.b16 %v381
    %v454 = vunpack.c.l.b16 %v382
    %v455 = vunpack.c.h.b16 %v382
    %v456 = vunpack.c.l.b16 %v383
    %v457 = vunpack.c.h.b16 %v383
    %v458 = vunpack.c.l.b16 %v384
    %v459 = vunpack.c.h.b16 %v384
    %v460 = vunpack.c.l.b16 %v385
    %v461 = vunpack.c.h.b16 %v385
    %v462 = vunpack.c.l.b16 %v386
    %v463 = vunpack.c.h.b16 %v386
    %v464 = vunpack.c.l.b16 %v387
    %v465 = vunpack.c.h.b16 %v387
    %v466 = vunpack.c.l.b16 %v388
    %v467 = vunpack.c.h.b16 %v388
    %v468 = vunpack.c.l.b16 %v389
    %v469 = vunpack.c.h.b16 %v389
    %v470 = vunpack.c.l.b16 %v390
    %v471 = vunpack.c.h.b16 %v390
    %v472 = vunpack.c.l.b16 %v391
    %v473 = vunpack.c.h.b16 %v391
    %v474 = vunpack.c.l.b16 %v392
    %v475 = vunpack.c.h.b16 %v392
    %v476 = vunpack.c.l.b16 %v393
    %v477 = vunpack.c.h.b16 %v393
    %v478 = vunpack.c.l.b16 %v394
    %v479 = vunpack.c.h.b16 %v394
    %v480 = vunpack.c.l.b16 %v395
    %v481 = vunpack.c.h.b16 %v395
    %v482 = vunpack.c.l.b16 %v396
    %v483 = vunpack.c.h.b16 %v396
    %v484 = vunpack.c.l.b16 %v397
    %v485 = vunpack.c.h.b16 %v397
    %v486 = vunpack.c.l.b16 %v398
    %v487 = vunpack.c.h.b16 %v398
    %v488 = vunpack.c.l.b16 %v399
    %v489 = vunpack.c.h.b16 %v399
    %v490 = vunpack.c.l.b16 %v400
    %v491 = vunpack.c.h.b16 %v400
    %v492 = vunpack.c.l.b16 %v401
    %v493 = vunpack.c.h.b16 %v401
    %v494 = vunpack.c.l.b16 %v402
    %v495 = vunpack.c.h.b16 %v402
    %v496 = vunpack.c.l.b16 %v403
    %v497 = vunpack.c.h.b16 %v403
    %v498 = vunpack.c.l.b16 %v404
    %v499 = vunpack.c.h.b16 %v404
    %v500 = vunpack.c.l.b16 %v405
    %v501 = vunpack.c.h.b16 %v405
    %v502 = vunpack.c.l.b16 %v406
    %v503 = vunpack.c.h.b16 %v406
    %v504 = vunpack.c.l.b16 %v407
    %v505 = vunpack.c.h.b16 %v407
    %v506 = vunpack.c.l.b16 %v408
    %v507 = vunpack.c.h.b16 %v408
    %v508 = vunpack.c.l.b16 %v409
    %v509 = vunpack.c.h.b16 %v409
    %v510 = vunpack.c.l.b16 %v410
    %v511 = vunpack.c.h.b16 %v410
    %v512 = vunpack.c.l.b16 %v411
    %v513 = vunpack.c.h.b16 %v411
    %v514 = vpack.c.b16 %v452, %v450
    %v515 = vpack.c.b16 %v453, %v451
    %v516 = vpack.c.b16 %v456, %v454
    %v517 = vpack.c.b16 %v457, %v455
    %v518 = vpack.c.b16 %v460, %v458
    %v519 = vpack.c.b16 %v461, %v459
    %v520 = vpack.c.b16 %v464, %v462
    %v521 = vpack.c.b16 %v465, %v463
    %v522 = vpack.c.b16 %v468, %v466
    %v523 = vpack.c.b16 %v469, %v467
    %v524 = vpack.c.b16 %v472, %v470
    %v525 = vpack.c.b16 %v473, %v471
    %v526 = vpack.c.b16 %v476, %v474
    %v527 = vpack.c.b16 %v477, %v475
    %v528 = vpack.c.b16 %v480, %v478
    %v529 = vpack.c.b16 %v481, %v479
    %v530 = vpack.c.b16 %v484, %v482
    %v531 = vpack.c.b16 %v485, %v483
    %v532 = vpack.c.b16 %v488, %v486
    %v533 = vpack.c.b16 %v489, %v487
    %v534 = vpack.c.b16 %v492, %v490
    %v535 = vpack.c.b16 %v493, %v491
    %v536 = vpack.c.b16 %v496, %v494
    %v537 = vpack.c.b16 %v497, %v495
    %v538 = vpack.c.b16 %v500, %v498
    %v539 = vpack.c.b16 %v501, %v499
    %v540 = vpack.c.b16 %v504, %v502
    %v541 = vpack.c.b16 %v505, %v503
    %v542 = vpack.c.b16 %v508, %v506
    %v543 = vpack.c.b16 %v509, %v507
    %v544 = vpack.c.b16 %v512, %v510
    %v545 = vpack.c.b16 %v513, %v511
    %578 = vmatpush.bf16.msra.mxu0 %v528
    %579 = vmatpush.bf16.msra.mxu0 %v526
    %580 = vmatpush.bf16.msra.mxu0 %v524
    %581 = vmatpush.bf16.msra.mxu0 %v522
    %582 = vmatpush.bf16.msra.mxu0 %v520
    %583 = vmatpush.bf16.msra.mxu0 %v518
    %584 = vmatpush.bf16.msra.mxu0 %v516
    %585 = vmatpush.bf16.msra.mxu0 %v514
    %586 = vmatmul.bf16.gmra.mxu0 %v378
    %v587 = vpop.f32.mrf.mxu0
    %v588 = vadd.f32 %v414, %v587
    %v589 = vpop.f32.mrf.mxu0
    %v590 = vadd.f32 %v414, %v589
    %591 = vdwg.mxu0
    %592 = vmatpush.bf16.msra.mxu0 %v544
    %593 = vmatpush.bf16.msra.mxu0 %v542
    %594 = vmatpush.bf16.msra.mxu0 %v540
    %595 = vmatpush.bf16.msra.mxu0 %v538
    %596 = vmatpush.bf16.msra.mxu0 %v536
    %597 = vmatpush.bf16.msra.mxu0 %v534
    %598 = vmatpush.bf16.msra.mxu0 %v532
    %599 = vmatpush.bf16.msra.mxu0 %v530
    %600 = vmatmul.bf16.gmra.mxu0 %v379
    %v601 = vpop.f32.mrf.mxu0
    %v602 = vadd.f32 %v588, %v601
    %v603 = vpop.f32.mrf.mxu0
    %v604 = vadd.f32 %v590, %v603
    %605 = vdwg.mxu0
    %606 = vmatpush.bf16.msra.mxu0 %v529
    %607 = vmatpush.bf16.msra.mxu0 %v527
    %608 = vmatpush.bf16.msra.mxu0 %v525
    %609 = vmatpush.bf16.msra.mxu0 %v523
    %610 = vmatpush.bf16.msra.mxu0 %v521
    %611 = vmatpush.bf16.msra.mxu0 %v519
    %612 = vmatpush.bf16.msra.mxu0 %v517
    %613 = vmatpush.bf16.msra.mxu0 %v515
    %614 = vmatmul.bf16.gmra.mxu0 %v378
    %v615 = vpop.f32.mrf.mxu0
    %v616 = vadd.f32 %v415, %v615
    %v617 = vpop.f32.mrf.mxu0
    %v618 = vadd.f32 %v415, %v617
    %619 = vdwg.mxu0
    %620 = vmatpush.bf16.msra.mxu0 %v545
    %621 = vmatpush.bf16.msra.mxu0 %v543
    %622 = vmatpush.bf16.msra.mxu0 %v541
    %623 = vmatpush.bf16.msra.mxu0 %v539
    %624 = vmatpush.bf16.msra.mxu0 %v537
    %625 = vmatpush.bf16.msra.mxu0 %v535
    %626 = vmatpush.bf16.msra.mxu0 %v533
    %627 = vmatpush.bf16.msra.mxu0 %v531
    %628 = vmatmul.bf16.gmra.mxu0 %v379
    %v629 = vpop.f32.mrf.mxu0
    %v630 = vadd.f32 %v616, %v629
    %v631 = vpop.f32.mrf.mxu0
    %v632 = vadd.f32 %v618, %v631
    %633 = vdwg.mxu0
    %v634 = vmul.f32 %v602, %v602
    %v635 = vmul.f32 %v630, %v630
    %v636 = vmul.f32 %v604, %v604
    %v637 = vmul.f32 %v632, %v632
    %v638 = vadd.f32 %v634, %v635
    %639 = vadd.xlane.f32.xlu0 %v638
    %v640 = vpop.xlane.xlu0 %639
    %v641 = vadd.f32 %v636, %v637
    %642 = vadd.xlane.f32.xlu0 %v641
    %v643 = vpop.xlane.xlu0 %642
    %v644 = vmax.f32 %v640, 1e-24
    %v645 = vmax.f32 %v643, 1e-24
    %v646 = vrsqrt.pop %v644
    %v647 = vmul.f32 %v646, %v644
    %v648 = vmul.f32 %v647, %v646
    %v649 = vmul.f32 0.5, %v648
    %v650 = vsub.f32 1.5, %v649
    %v651 = vmul.f32 %v646, %v650
    %vm652 = vweird.f32 %v644
    %vm653 = vweird.f32 %v646
    %vm654 = vmor %vm652, %vm653
    %v655 = vsel %vm654, %v646, %v651
    %v656 = vrsqrt.pop %v645
    %v657 = vmul.f32 %v656, %v645
    %v658 = vmul.f32 %v657, %v656
    %v659 = vmul.f32 0.5, %v658
    %v660 = vsub.f32 1.5, %v659
    %v661 = vmul.f32 %v656, %v660
    %vm662 = vweird.f32 %v645
    %vm663 = vweird.f32 %v656
    %vm664 = vmor %vm662, %vm663
    %v665 = vsel %vm664, %v656, %v661
    %v666 = vmul.f32 %v602, %v655
    %v667 = vmul.f32 %v630, %v655
    %v668 = vmul.f32 %v604, %v665
    %v669 = vmul.f32 %v632, %v665
    %670 = vst [vmem:[#allocation10] sm:$0xff] %v666
    %671 = vst [vmem:[#allocation10 + $0x8] sm:$0xff] %v667
    %672 = vst [vmem:[#allocation10 + $0x10] sm:$0xff] %v668
    %673 = vst [vmem:[#allocation10 + $0x18] sm:$0xff] %v669
    // Predicated region
    $region38: #{tpu_custom_call.1} parent=1 // pred_check
      _
    $region39: #{tpu_custom_call.1} parent=1 // pred_check_branch
      %675 = sbr.rel (0) target = $region41
    $region40: #{tpu_custom_call.1} parent=1 // pred_region
      %677 = vsyncadd [#allocation4], 0
      %s678 = sshll.u32 [#allocation10], 4
      %s679 = int_to_ptr.vmem [resolvable:$true] %s678
      %s680 = sshll.u32 %s5, 4
      %s681 = int_to_ptr.hbm [resolvable:$true] %s680
      %686 = dma.vmem_to_hbm [thread:$0]  %s679, 512, %s681, [#allocation4], 256, 256, 16
    $region41: #{tpu_custom_call.1} parent=1 // pred_fallthru
      _
    // Predicated region
    $region42: #{tpu_custom_call.1} parent=1 // pred_check
      _
    $region43: #{tpu_custom_call.1} parent=1 // pred_check_branch
      %688 = sbr.rel (0) target = $region45
    $region44: #{tpu_custom_call.1} parent=1 // pred_region
      %690 = dma.done [#allocation4], 512
    $region45: #{tpu_custom_call.1} parent=1 // pred_fallthru
      _
    %691 = vsyncpa [#allocation3], 1
    %692 = vsyncpa [#allocation6], 1
    %693 = vsyncpa [#allocation9], 1
    %694 = vsyncpa [#allocation4], 1

</llo_original>
